<compile_context>
chip_gen: v7x
topology: tpu7x:2x2x1
jax: 0.10.0
libtpu: 0.0.40
codegen_flags: <defaults>
</compile_context>

<pallas_src>
import math
import functools

import numpy as np
import jax
import jax.numpy as jnp
from jax.experimental import pallas as pl
from jax.experimental.pallas import tpu as pltpu


# ----------------------------- config (deterministic, in-script) ---------------------------------
SAMPLE_RATE = 800          # Hz
WIN_SIZE = 0.025           # seconds  -> win_length = 20
HOP_SIZE = 0.010           # seconds  -> hop_length = 8
MIN_AMP = 1e-10
NUM_FILTERS = 8
ALPHA = 1.0

WIN_LENGTH = int(WIN_SIZE * SAMPLE_RATE)                  # 20
HOP_LENGTH = int(HOP_SIZE * SAMPLE_RATE)                  # 8
N_FFT = 2 ** math.ceil(math.log2(WIN_LENGTH))             # 32
N_FREQ = N_FFT // 2 + 1                                   # 17
FREQ_PAD = 32                                             # sublane-aligned frequency padding
assert N_FREQ <= FREQ_PAD

MAX_TM = 4096              # max frames per grid step (lane dimension of one tile), multiple of 128


# ----------------------------- parameter / constant construction ---------------------------------
def _hz_to_mel_htk(f):
    return 2595.0 * np.log10(1.0 + f / 700.0)


def _mel_to_hz_htk(m):
    return 700.0 * (10.0 ** (m / 2595.0) - 1.0)


def _mel_filterbank(sr, n_fft, n_mels, fmin, fmax):
    """Replicates librosa.filters.mel(htk=True, norm=None)."""
    fftfreqs = np.linspace(0.0, sr / 2.0, n_fft // 2 + 1)
    mel_pts = np.linspace(_hz_to_mel_htk(fmin), _hz_to_mel_htk(fmax), n_mels + 2)
    mel_f = _mel_to_hz_htk(mel_pts)
    fdiff = np.diff(mel_f)
    ramps = mel_f[:, None] - fftfreqs[None, :]
    weights = np.zeros((n_mels, n_fft // 2 + 1), dtype=np.float64)
    for i in range(n_mels):
        lower = -ramps[i] / fdiff[i]
        upper = ramps[i + 2] / fdiff[i + 1]
        weights[i] = np.maximum(0.0, np.minimum(lower, upper))
    return weights.astype(np.float32)


def _hann(n):
    """torch.hann_window(n, periodic=False, dtype=float64)."""
    if n == 1:
        return np.ones(1, dtype=np.float64)
    k = np.arange(n, dtype=np.float64)
    return 0.5 - 0.5 * np.cos(2.0 * np.pi * k / (n - 1))


BASE_WINDOW = _hann(WIN_LENGTH)                                        # [win] float64

# rFFT-as-matmul constants (built in float64, cast once)
_kk = np.arange(N_FREQ, dtype=np.float64)[:, None]
_nn = np.arange(WIN_LENGTH, dtype=np.float64)[None, :]
_ang = 2.0 * np.pi * _kk * _nn / N_FFT
DFT_COS = np.cos(_ang)                                                 # [n_freq, win] float64
DFT_SIN = np.sin(_ang)                                                 # [n_freq, win] float64

# Fused kernel constant: rows 0..16 = cos * hann / sr, rows 32..48 = -sin * hann / sr.
DFTW_FUSED = np.zeros((2 * FREQ_PAD, WIN_LENGTH), dtype=np.float64)
DFTW_FUSED[:N_FREQ, :] = DFT_COS * BASE_WINDOW[None, :] / SAMPLE_RATE
DFTW_FUSED[FREQ_PAD:FREQ_PAD + N_FREQ, :] = -DFT_SIN * BASE_WINDOW[None, :] / SAMPLE_RATE
DFTW_FUSED = DFTW_FUSED.astype(np.float32)                             # [64, win]

MEL_BASIS = _mel_filterbank(SAMPLE_RATE, N_FFT, NUM_FILTERS, 0.0, SAMPLE_RATE // 2)  # [n_mels, n_freq]
MEL_PAD = np.zeros((NUM_FILTERS, FREQ_PAD), dtype=np.float32)
MEL_PAD[:, :N_FREQ] = MEL_BASIS                                        # [n_mels, 32]


# ----------------------------------- Pallas kernel ------------------------------------------------
def _logmel_kernel(frames_ref, dftw_ref, mel_ref, out_ref, *, min_amp):
    # frames_ref: [win, TM]     preemphasized, un-windowed frames, one frame per lane column
    # dftw_ref:   [64, win]     fused (hann * cos / sr | -hann * sin / sr) matrix (resident)
    # mel_ref:    [n_mels, 32]  mel filterbank, zero padded to 32 freqs (resident)
    # out_ref:    [n_mels, TM]
    y = jnp.dot(dftw_ref[...], frames_ref[...], preferred_element_type=jnp.float32)  # [64, TM]
    re = y[:FREQ_PAD, :]                                                 # sublane-aligned split
    im = y[FREQ_PAD:, :]
    amp = jnp.sqrt(re * re + im * im)                                    # |fft| / sample_rate, [32, TM]
    mel = jnp.dot(mel_ref[...], amp, preferred_element_type=jnp.float32)  # [n_mels, TM]
    out_ref[...] = jnp.log10(mel + min_amp)                              # lane-dense store


# ----------------------------------- glue (plain JAX) ---------------------------------------------
def _round_up(x, m):
    return ((x + m - 1) // m) * m


def rasr_logmel(raw_audio, length):
    """
    :param raw_audio: [B, T] float32
    :param length:    [B] int32 (samples)
    :return: (log-mel features [B, T_frames, num_filters], frame lengths [B])
    """
    B, T = raw_audio.shape
    assert T > 0

    # preemphasis: y[0] = 0, y[t] = x[t] - alpha * x[t-1]
    pre = jnp.concatenate(
        [jnp.zeros((B, 1), raw_audio.dtype), raw_audio[:, 1:] - ALPHA * raw_audio[:, :-1]], axis=1
    )

    res_size = max(T - WIN_LENGTH + HOP_LENGTH - 1, 0) // HOP_LENGTH + 1
    res_length = jnp.maximum(length - WIN_LENGTH + HOP_LENGTH - 1, 0) // HOP_LENGTH + 1

    pad_batch = WIN_LENGTH - (T - (res_size - 1) * HOP_LENGTH)
    padded = jnp.pad(pre, ((0, 0), (0, pad_batch)))                     # [B, Tp]

    # unfold into frames, b-major, frames on lanes: frames_T[j, b*res_size + t] = padded[b, t*hop + j]
    idx = jnp.arange(res_size)[None, :] * HOP_LENGTH + jnp.arange(WIN_LENGTH)[:, None]  # [win, Tf]
    frames_T = padded[:, idx]                                            # [B, win, Tf]
    frames_T = frames_T.transpose(1, 0, 2).reshape(WIN_LENGTH, B * res_size)            # [win, R]

    # lane-tile selection: TM multiple of 128, <= MAX_TM, >= 2 grid steps when possible (v7x has 2 TCs)
    R = B * res_size
    Rp0 = _round_up(R, 128)
    if Rp0 <= 128:
        tm = 128
    else:
        steps = max(2, math.ceil(Rp0 / MAX_TM))
        tm = min(MAX_TM, _round_up(math.ceil(Rp0 / steps), 128))
    Rp = _round_up(Rp0, tm)
    if Rp != R:
        frames_T = jnp.pad(frames_T, ((0, 0), (0, Rp - R)))

    dftw_c = jnp.asarray(DFTW_FUSED)          # [64, win]   resident constant
    mel_c = jnp.asarray(MEL_PAD)              # [n_mels, 32] resident constant

    kernel = functools.partial(_logmel_kernel, min_amp=MIN_AMP)

    out_T = pl.pallas_call(
        kernel,
        out_shape=jax.ShapeDtypeStruct((NUM_FILTERS, Rp), jnp.float32),
        grid_spec=pltpu.PrefetchScalarGridSpec(
            num_scalar_prefetch=0,
            grid=(Rp // tm,),
            in_specs=[
                pl.BlockSpec((WIN_LENGTH, tm), lambda i: (0, i)),             # frames (streamed)
                pl.BlockSpec((2 * FREQ_PAD, WIN_LENGTH), lambda i: (0, 0)),   # fused DFT*window (resident)
                pl.BlockSpec((NUM_FILTERS, FREQ_PAD), lambda i: (0, 0)),      # mel basis (resident)
            ],
            out_specs=pl.BlockSpec((NUM_FILTERS, tm), lambda i: (0, i)),
        ),
        compiler_params=pltpu.CompilerParams(dimension_semantics=("parallel",)),
    )(frames_T, dftw_c, mel_c)

    # un-flatten (b-major): [n_mels, Rp] -> [B, T_frames, n_mels]; padded tail columns are dropped
    feats = out_T[:, :R].reshape(NUM_FILTERS, B, res_size).transpose(1, 2, 0)

    # ---- per-sequence last-frame fixup (only B frames): recompute with the sequence-specific ----
    # ---- Hann window in plain JAX and scatter into the output (no full-array rewrite).        ----
    last_start = (res_length - 1) * HOP_LENGTH                           # [B]
    j = jnp.arange(WIN_LENGTH)
    gather_idx = last_start[:, None] + j[None, :]                        # [B, win]
    last_frames = jnp.take_along_axis(padded, gather_idx, axis=1)        # [B, win]

    last_win_size = (length - last_start).astype(jnp.float32)            # [B]
    jf = j.astype(jnp.float32)[None, :]
    denom = jnp.maximum(last_win_size - 1.0, 1.0)[:, None]
    lw = 0.5 - 0.5 * jnp.cos(2.0 * np.pi * jf / denom)
    lw = jnp.where(last_win_size[:, None] == 1.0, (jf == 0).astype(jnp.float32), lw)
    lw = jnp.where(jf < last_win_size[:, None], lw, 0.0)                 # [B, win]

    sm_last = last_frames * lw                                           # [B, win]
    cos_c = jnp.asarray(DFT_COS.astype(np.float32))                      # [n_freq, win]
    sin_c = jnp.asarray(DFT_SIN.astype(np.float32))
    re_l = jnp.sum(sm_last[:, None, :] * cos_c[None, :, :], axis=-1) / SAMPLE_RATE   # [B, n_freq]
    im_l = -jnp.sum(sm_last[:, None, :] * sin_c[None, :, :], axis=-1) / SAMPLE_RATE
    amp_l = jnp.sqrt(re_l * re_l + im_l * im_l)
    mel_l = jnp.sum(amp_l[:, None, :] * jnp.asarray(MEL_BASIS)[None, :, :], axis=-1)  # [B, n_mels]
    feat_last = jnp.log10(mel_l + MIN_AMP)

    feats = feats.at[jnp.arange(B), res_length - 1, :].set(feat_last)
    return feats, res_length


# ----------------------------------- reference (numpy, float64) -----------------------------------
def _reference(raw_audio, length):
    raw = np.asarray(raw_audio, dtype=np.float64)
    length = np.asarray(length)
    B, T = raw.shape
    res_size = max(T - WIN_LENGTH + HOP_LENGTH - 1, 0) // HOP_LENGTH + 1
    res_length = np.maximum(length - WIN_LENGTH + HOP_LENGTH - 1, 0) // HOP_LENGTH + 1

    pre = raw.copy()
    pre[:, 1:] = raw[:, 1:] - ALPHA * raw[:, :-1]
    pre[:, 0] = 0.0

    last_win_size = length - (res_length - 1) * HOP_LENGTH
    last_pad_batch = WIN_LENGTH - (T - (res_size - 1) * HOP_LENGTH)
    padded = np.pad(pre, ((0, 0), (0, last_pad_batch)))

    idx = np.arange(res_size)[:, None] * HOP_LENGTH + np.arange(WIN_LENGTH)[None, :]
    windowed = padded[:, idx]                                          # [B, Tf, win]
    smoothed = windowed * _hann(WIN_LENGTH)[None, None, :]
    for b in range(B):
        lw = np.zeros(WIN_LENGTH, dtype=np.float64)
        lw[: int(last_win_size[b])] = _hann(int(last_win_size[b]))
        smoothed[b, int(res_length[b]) - 1] = windowed[b, int(res_length[b]) - 1] * lw

    fft = np.fft.rfft(smoothed, n=N_FFT, axis=-1) / SAMPLE_RATE
    amp = np.abs(fft)
    mel = np.einsum("btf,mf->btm", amp, MEL_BASIS.astype(np.float64))
    return np.log10(mel + MIN_AMP), res_length


# ----------------------------------- main ----------------------------------------------------------
if __name__ == "__main__":
    key = jax.random.PRNGKey(0)
    B, T = 2, 200
    raw_audio = jax.random.normal(key, (B, T), dtype=jnp.float32)
    length = jnp.array([200, 167], dtype=jnp.int32)

    feats, frame_lens = jax.jit(rasr_logmel)(raw_audio, length)
    feats = jax.block_until_ready(feats)
    frame_lens = jax.block_until_ready(frame_lens)

    ref_feats, ref_lens = _reference(np.asarray(raw_audio), np.asarray(length))
    assert feats.shape == ref_feats.shape, (feats.shape, ref_feats.shape)
    assert np.array_equal(np.asarray(frame_lens), ref_lens)
    np.testing.assert_allclose(np.asarray(feats), ref_feats, rtol=1e-3, atol=1e-4)

    print("KERNEL_OK")
</pallas_src>

<mosaic_0001>
module attributes {stable_mosaic.version = 11 : i64} {
  func.func @_logmel_kernel(%arg0: i32, %arg1: memref<20x128xf32, #tpu.memory_space<vmem>>, %arg2: memref<64x20xf32, #tpu.memory_space<vmem>>, %arg3: memref<8x32xf32, #tpu.memory_space<vmem>>, %arg4: memref<8x128xf32, #tpu.memory_space<vmem>>) attributes {dimension_semantics = [#tpu.dimension_semantics<parallel>], iteration_bounds = array<i64: 1>, scalar_prefetch = 0 : i64, scratch_operands = 0 : i64, tpu.core_type = #tpu.core_type<tc>, window_params = [{transform_indices = @transform_0, window_bounds = array<i64: 20, 128>}, {pipeline_mode = #tpu.pipeline_mode<synchronous>, transform_indices = @transform_1, window_bounds = array<i64: 64, 20>}, {pipeline_mode = #tpu.pipeline_mode<synchronous>, transform_indices = @transform_2, window_bounds = array<i64: 8, 32>}, {transform_indices = @transform_3, window_bounds = array<i64: 8, 128>}]} {
    %c0 = arith.constant 0 : index
    %c0_0 = arith.constant 0 : index
    %0 = vector.load %arg2[%c0, %c0_0] : memref<64x20xf32, #tpu.memory_space<vmem>>, vector<64x20xf32>
    %c0_1 = arith.constant 0 : index
    %c0_2 = arith.constant 0 : index
    %1 = vector.load %arg1[%c0_1, %c0_2] : memref<20x128xf32, #tpu.memory_space<vmem>>, vector<20x128xf32>
    %cst = arith.constant dense<0.000000e+00> : vector<64x128xf32>
    %2 = tpu.matmul %0, %1, %cst {dimension_numbers = #tpu.dot_dimension_numbers<[1], [0], [0], [1], [0, 0, 1, 1], [], []>} : vector<64x20xf32>, vector<20x128xf32>, vector<64x128xf32> -> vector<64x128xf32>
    %3 = vector.extract_strided_slice %2 {offsets = [0, 0], sizes = [32, 128], strides = [1, 1]} : vector<64x128xf32> to vector<32x128xf32>
    %4 = vector.extract_strided_slice %2 {offsets = [32, 0], sizes = [32, 128], strides = [1, 1]} : vector<64x128xf32> to vector<32x128xf32>
    %5 = arith.mulf %3, %3 : vector<32x128xf32>
    %6 = arith.mulf %4, %4 : vector<32x128xf32>
    %7 = arith.addf %5, %6 : vector<32x128xf32>
    %8 = math.sqrt %7 : vector<32x128xf32>
    %c0_3 = arith.constant 0 : index
    %c0_4 = arith.constant 0 : index
    %9 = vector.load %arg3[%c0_3, %c0_4] : memref<8x32xf32, #tpu.memory_space<vmem>>, vector<8x32xf32>
    %cst_5 = arith.constant dense<0.000000e+00> : vector<8x128xf32>
    %10 = tpu.matmul %9, %8, %cst_5 {dimension_numbers = #tpu.dot_dimension_numbers<[1], [0], [0], [1], [0, 0, 1, 1], [], []>} : vector<8x32xf32>, vector<32x128xf32>, vector<8x128xf32> -> vector<8x128xf32>
    %cst_6 = arith.constant 1.000000e-10 : f32
    %11 = vector.broadcast %cst_6 : f32 to vector<8x128xf32>
    %12 = arith.addf %10, %11 : vector<8x128xf32>
    %13 = math.log %12 : vector<8x128xf32>
    %cst_7 = arith.constant 0.434294492 : f32
    %14 = vector.broadcast %cst_7 : f32 to vector<8x128xf32>
    %15 = arith.mulf %13, %14 : vector<8x128xf32>
    %c0_8 = arith.constant 0 : index
    %c0_9 = arith.constant 0 : index
    %16 = vector.load %arg4[%c0_8, %c0_9] : memref<8x128xf32, #tpu.memory_space<vmem>>, vector<8x128xf32>
    tpu.vector_store %arg4[%c0_8, %c0_9], %15 {strides = array<i32>} : memref<8x128xf32, #tpu.memory_space<vmem>>, vector<8x128xf32>,
    return
  }
  func.func @transform_0(%arg0: i32) -> (i32, i32) {
    %c0_i32 = arith.constant 0 : i32
    %c0_i32_0 = arith.constant 0 : i32
    return %c0_i32, %arg0 : i32, i32
  }
  func.func @transform_1(%arg0: i32) -> (i32, i32) {
    %c0_i32 = arith.constant 0 : i32
    %c0_i32_0 = arith.constant 0 : i32
    %c0_i32_1 = arith.constant 0 : i32
    return %c0_i32, %c0_i32_0 : i32, i32
  }
  func.func @transform_2(%arg0: i32) -> (i32, i32) {
    %c0_i32 = arith.constant 0 : i32
    %c0_i32_0 = arith.constant 0 : i32
    %c0_i32_1 = arith.constant 0 : i32
    return %c0_i32, %c0_i32_0 : i32, i32
  }
  func.func @transform_3(%arg0: i32) -> (i32, i32) {
    %c0_i32 = arith.constant 0 : i32
    %c0_i32_0 = arith.constant 0 : i32
    return %c0_i32, %arg0 : i32, i32
  }
}

</mosaic_0001>

<llo_original>
// kernel: rasr_logmel.1
$region0: #{rasr_logmel.1}
  #allocation0 [shape = 'u32[]', space=smem, size = 0x4, offset = 0x4, fixed_abs, tag = 'smem constant byte address 0x4 - core index']
  #allocation1 [shape = 'u32[144,128]{1,0:T(1,128)}', space=vmem, size = 0x12000, scoped, tag = 'internal scratch']
  %s0 = inlined_call_operand.vmem [shape: f32[20,128], index: 0, kind: input, shape index: {}]
  %s1 = inlined_call_operand.vmem [shape: f32[64,20], index: 1, kind: input, shape index: {}]
  %s2 = inlined_call_operand.vmem [shape: f32[8,32], index: 2, kind: input, shape index: {}]
  %s3 = inlined_call_operand.vmem [shape: f32[8,128], index: 3, kind: output, shape index: {}]
  %s4 = sld [smem:[#allocation0]]
  $region22: #{rasr_logmel.1} parent=0
    _
  %s6 = ssub.s32 1, %s4
  %s7 = scalar_select 0, %s6, %s4
  // Predicated region
  $region2: #{rasr_logmel.1} parent=0 // pred_check
    _
  $region3: #{rasr_logmel.1} parent=0 // pred_check_branch
    %9 = sbr.rel (0) target = $region5
  $region4: #{rasr_logmel.1} parent=0 // pred_region
    _
  $region5: #{rasr_logmel.1} parent=0 // pred_fallthru
    _
  // Predicated region
  $region6: #{rasr_logmel.1} parent=0 // pred_check
    _
  $region7: #{rasr_logmel.1} parent=0 // pred_check_branch
    %11 = sbr.rel (0) target = $region9
  $region8: #{rasr_logmel.1} parent=0 // pred_region
    _
  $region9: #{rasr_logmel.1} parent=0 // pred_fallthru
    _
  // Predicated region
  $region10: #{rasr_logmel.1} parent=0 // pred_check
    _
  $region11: #{rasr_logmel.1} parent=0 // pred_check_branch
    %13 = sbr.rel (0) target = $region13
  $region12: #{rasr_logmel.1} parent=0 // pred_region
    _
  $region13: #{rasr_logmel.1} parent=0 // pred_fallthru
    _
  %v14 = vld [vmem:[%s1] sm:$0xff]
  %v15 = vld [vmem:[%s1 + $0x8] sm:$0xff]
  %v16 = vld [vmem:[%s1 + $0x10] sm:$0xff]
  %v17 = vld [vmem:[%s1 + $0x18] sm:$0xff]
  %v18 = vld [vmem:[%s1 + $0x20] sm:$0xff]
  %v19 = vld [vmem:[%s1 + $0x28] sm:$0xff]
  %v20 = vld [vmem:[%s1 + $0x30] sm:$0xff]
  %v21 = vld [vmem:[%s1 + $0x38] sm:$0xff]
  %v22 = vld [vmem:[%s0] sm:$0xff]
  %v23 = vld [vmem:[%s0 + $0x8] sm:$0xff]
  %v24 = vld [vmem:[%s0 + $0x10] sm:$0xf]
  %vm25 = vcmask 162816
  %v27 = vsel %vm25, %v14, 0
  %v30 = vsel %vm25, %v15, 0
  %v33 = vsel %vm25, %v16, 0
  %v36 = vsel %vm25, %v17, 0
  %v39 = vsel %vm25, %v18, 0
  %v42 = vsel %vm25, %v19, 0
  %v45 = vsel %vm25, %v20, 0
  %v48 = vsel %vm25, %v21, 0
  %vm50 = vcmask 1043456
  %v52 = vsel %vm50, %v24, 0
  %54 = vmatprep.subr.mxu0 0.0
  %55 = vmatpush1.msra.mxu0 %v22
  %56 = vmatprep.subr.mxu0 0.0
  %57 = vmatpush1.msra.mxu0 %v23
  %58 = vmatprep.subr.mxu0 0.0
  %59 = vmatpush1.msra.mxu0 %v52
  %60 = vmatprep.subr.mxu0 0.0
  %61 = vmatpush1.msra.mxu0 0.0
  %62 = vmatprep.subr.mxu0 0.0
  %63 = vmatpush1.msra.mxu0 0.0
  %64 = vmatprep.subr.mxu0 0.0
  %65 = vmatpush1.msra.mxu0 0.0
  %66 = vmatprep.subr.mxu0 0.0
  %67 = vmatpush1.msra.mxu0 0.0
  %68 = vmatprep.subr.mxu0 0.0
  %69 = vmatpush1.msra.mxu0 0.0
  %70 = vmatprep.subr.mxu0 0.0
  %71 = vmatpush1.msra.mxu0 0.0
  %72 = vmatprep.subr.mxu0 0.0
  %73 = vmatpush1.msra.mxu0 0.0
  %74 = vmatprep.subr.mxu0 0.0
  %75 = vmatpush1.msra.mxu0 0.0
  %76 = vmatprep.subr.mxu0 0.0
  %77 = vmatpush1.msra.mxu0 0.0
  %78 = vmatprep.subr.mxu0 0.0
  %79 = vmatpush1.msra.mxu0 0.0
  %80 = vmatprep.subr.mxu0 0.0
  %81 = vmatpush1.msra.mxu0 0.0
  %82 = vmatprep.subr.mxu0 0.0
  %83 = vmatpush1.msra.mxu0 0.0
  %84 = vmatprep.subr.mxu0 0.0
  %85 = vmatpush1.msra.mxu0 0.0
  %86 = vmatprep.subr.mxu0 0.0
  %87 = vmatpush1.msra.mxu0 0.0
  %88 = vmatprep.subr.mxu0 0.0
  %89 = vmatpush1.msra.mxu0 0.0
  %90 = vmatprep.subr.mxu0 0.0
  %91 = vmatpush1.msra.mxu0 0.0
  %92 = vmatprep.subr.mxu0 0.0
  %93 = vmatpush1.msra.mxu0 0.0
  %94 = vmatprep.subr.mxu0 0.0
  %95 = vmatpush1.msra.mxu0 0.0
  %96 = vmatprep.subr.mxu0 0.0
  %97 = vmatpush1.msra.mxu0 0.0
  %98 = vmatprep.subr.mxu0 0.0
  %99 = vmatpush1.msra.mxu0 0.0
  %100 = vmatprep.subr.mxu0 0.0
  %101 = vmatpush1.msra.mxu0 0.0
  %102 = vmatprep.subr.mxu0 0.0
  %103 = vmatpush1.msra.mxu0 0.0
  %104 = vmatprep.subr.mxu0 0.0
  %105 = vmatpush1.msra.mxu0 0.0
  %106 = vmatprep.subr.mxu0 0.0
  %107 = vmatpush1.msra.mxu0 0.0
  %108 = vmatprep.subr.mxu0 0.0
  %109 = vmatpush1.msra.mxu0 0.0
  %110 = vmatprep.subr.mxu0 0.0
  %111 = vmatpush1.msra.mxu0 0.0
  %112 = vmatprep.subr.mxu0 0.0
  %113 = vmatpush1.msra.mxu0 0.0
  %114 = vmatprep.subr.mxu0 0.0
  %115 = vmatpush1.msra.mxu0 0.0
  %116 = vmatprep.subr.mxu0 0.0
  %117 = vmatpush1.msra.mxu0 0.0
  %118 = vmatprep.mubr.f32.mxu0 0.0
  %119 = vmatmul.mubr.f32.gmra.mrb[0].mxu0 %v27
  %v120 = vpop.f32.mrb[0].mxu0
  %v121 = vadd.f32 0.0, %v120
  %v122 = vpop.f32.mrb[0].mxu0
  %123 = vmatprep.mubr.f32.mxu0 0.0
  %124 = vmatmul.mubr.f32.gmra.mrb[0].mxu0 %v30
  %v125 = vpop.f32.mrb[0].mxu0
  %v126 = vadd.f32 0.0, %v125
  %v127 = vpop.f32.mrb[0].mxu0
  %128 = vmatprep.mubr.f32.mxu0 0.0
  %129 = vmatmul.mubr.f32.gmra.mrb[0].mxu0 %v33
  %v130 = vpop.f32.mrb[0].mxu0
  %v131 = vadd.f32 0.0, %v130
  %v132 = vpop.f32.mrb[0].mxu0
  %133 = vmatprep.mubr.f32.mxu0 0.0
  %134 = vmatmul.mubr.f32.gmra.mrb[0].mxu0 %v36
  %v135 = vpop.f32.mrb[0].mxu0
  %v136 = vadd.f32 0.0, %v135
  %v137 = vpop.f32.mrb[0].mxu0
  %138 = vmatprep.mubr.f32.mxu0 0.0
  %139 = vmatmul.mubr.f32.gmra.mrb[0].mxu0 %v39
  %v140 = vpop.f32.mrb[0].mxu0
  %v141 = vadd.f32 0.0, %v140
  %v142 = vpop.f32.mrb[0].mxu0
  %143 = vmatprep.mubr.f32.mxu0 0.0
  %144 = vmatmul.mubr.f32.gmra.mrb[0].mxu0 %v42
  %v145 = vpop.f32.mrb[0].mxu0
  %v146 = vadd.f32 0.0, %v145
  %v147 = vpop.f32.mrb[0].mxu0
  %148 = vmatprep.mubr.f32.mxu0 0.0
  %149 = vmatmul.mubr.f32.gmra.mrb[0].mxu0 %v45
  %v150 = vpop.f32.mrb[0].mxu0
  %v151 = vadd.f32 0.0, %v150
  %v152 = vpop.f32.mrb[0].mxu0
  %153 = vmatprep.mubr.f32.mxu0 0.0
  %154 = vmatmul.mubr.f32.gmra.mrb[0].mxu0 %v48
  %v155 = vpop.f32.mrb[0].mxu0
  %v156 = vadd.f32 0.0, %v155
  %v157 = vpop.f32.mrb[0].mxu0
  %158 = vdwg.mxu0
  %v159 = vmul.f32 %v121, %v121
  %v160 = vmul.f32 %v126, %v126
  %v161 = vmul.f32 %v131, %v131
  %v162 = vmul.f32 %v136, %v136
  %v163 = vmul.f32 %v141, %v141
  %v164 = vmul.f32 %v146, %v146
  %v165 = vmul.f32 %v151, %v151
  %v166 = vmul.f32 %v156, %v156
  %v167 = vadd.f32 %v159, %v163
  %v168 = vadd.f32 %v160, %v164
  %v169 = vadd.f32 %v161, %v165
  %v170 = vadd.f32 %v162, %v166
  %v171 = vrsqrt.pop %v167
  %v172 = vmul.f32 %v167, %v171
  %vm173 = vcmp.eq.f32.partialorder %v167, inf
  %v174 = vsel %vm173, %v167, %v172
  %vm175 = vcmp.eq.f32.partialorder %v167, 0.0
  %v176 = vand.u32 %v167, 2147483648
  %v177 = vsel %vm175, %v176, %v174
  %v178 = vrsqrt.pop %v168
  %v179 = vmul.f32 %v168, %v178
  %vm180 = vcmp.eq.f32.partialorder %v168, inf
  %v181 = vsel %vm180, %v168, %v179
  %vm182 = vcmp.eq.f32.partialorder %v168, 0.0
  %v183 = vand.u32 %v168, 2147483648
  %v184 = vsel %vm182, %v183, %v181
  %v185 = vrsqrt.pop %v169
  %v186 = vmul.f32 %v169, %v185
  %vm187 = vcmp.eq.f32.partialorder %v169, inf
  %v188 = vsel %vm187, %v169, %v186
  %vm189 = vcmp.eq.f32.partialorder %v169, 0.0
  %v190 = vand.u32 %v169, 2147483648
  %v191 = vsel %vm189, %v190, %v188
  %v192 = vrsqrt.pop %v170
  %v193 = vmul.f32 %v170, %v192
  %vm194 = vcmp.eq.f32.partialorder %v170, inf
  %v195 = vsel %vm194, %v170, %v193
  %vm196 = vcmp.eq.f32.partialorder %v170, 0.0
  %v197 = vand.u32 %v170, 2147483648
  %v198 = vsel %vm196, %v197, %v195
  %v199 = vld [vmem:[%s2] sm:$0xff]
  %vm200 = vcmask 261120
  %v202 = vsel %vm200, %v199, 0
  %204 = vmatprep.subr.mxu0 0.0
  %205 = vmatpush1.msra.mxu0 %v177
  %206 = vmatprep.subr.mxu0 0.0
  %207 = vmatpush1.msra.mxu0 %v184
  %208 = vmatprep.subr.mxu0 0.0
  %209 = vmatpush1.msra.mxu0 %v191
  %210 = vmatprep.subr.mxu0 0.0
  %211 = vmatpush1.msra.mxu0 %v198
  %212 = vmatprep.subr.mxu0 0.0
  %213 = vmatpush1.msra.mxu0 0.0
  %214 = vmatprep.subr.mxu0 0.0
  %215 = vmatpush1.msra.mxu0 0.0
  %216 = vmatprep.subr.mxu0 0.0
  %217 = vmatpush1.msra.mxu0 0.0
  %218 = vmatprep.subr.mxu0 0.0
  %219 = vmatpush1.msra.mxu0 0.0
  %220 = vmatprep.subr.mxu0 0.0
  %221 = vmatpush1.msra.mxu0 0.0
  %222 = vmatprep.subr.mxu0 0.0
  %223 = vmatpush1.msra.mxu0 0.0
  %224 = vmatprep.subr.mxu0 0.0
  %225 = vmatpush1.msra.mxu0 0.0
  %226 = vmatprep.subr.mxu0 0.0
  %227 = vmatpush1.msra.mxu0 0.0
  %228 = vmatprep.subr.mxu0 0.0
  %229 = vmatpush1.msra.mxu0 0.0
  %230 = vmatprep.subr.mxu0 0.0
  %231 = vmatpush1.msra.mxu0 0.0
  %232 = vmatprep.subr.mxu0 0.0
  %233 = vmatpush1.msra.mxu0 0.0
  %234 = vmatprep.subr.mxu0 0.0
  %235 = vmatpush1.msra.mxu0 0.0
  %236 = vmatprep.subr.mxu0 0.0
  %237 = vmatpush1.msra.mxu0 0.0
  %238 = vmatprep.subr.mxu0 0.0
  %239 = vmatpush1.msra.mxu0 0.0
  %240 = vmatprep.subr.mxu0 0.0
  %241 = vmatpush1.msra.mxu0 0.0
  %242 = vmatprep.subr.mxu0 0.0
  %243 = vmatpush1.msra.mxu0 0.0
  %244 = vmatprep.subr.mxu0 0.0
  %245 = vmatpush1.msra.mxu0 0.0
  %246 = vmatprep.subr.mxu0 0.0
  %247 = vmatpush1.msra.mxu0 0.0
  %248 = vmatprep.subr.mxu0 0.0
  %249 = vmatpush1.msra.mxu0 0.0
  %250 = vmatprep.subr.mxu0 0.0
  %251 = vmatpush1.msra.mxu0 0.0
  %252 = vmatprep.subr.mxu0 0.0
  %253 = vmatpush1.msra.mxu0 0.0
  %254 = vmatprep.subr.mxu0 0.0
  %255 = vmatpush1.msra.mxu0 0.0
  %256 = vmatprep.subr.mxu0 0.0
  %257 = vmatpush1.msra.mxu0 0.0
  %258 = vmatprep.subr.mxu0 0.0
  %259 = vmatpush1.msra.mxu0 0.0
  %260 = vmatprep.subr.mxu0 0.0
  %261 = vmatpush1.msra.mxu0 0.0
  %262 = vmatprep.subr.mxu0 0.0
  %263 = vmatpush1.msra.mxu0 0.0
  %264 = vmatprep.subr.mxu0 0.0
  %265 = vmatpush1.msra.mxu0 0.0
  %266 = vmatprep.subr.mxu0 0.0
  %267 = vmatpush1.msra.mxu0 0.0
  %268 = vmatprep.mubr.f32.mxu0 0.0
  %269 = vmatmul.mubr.f32.gmra.mrb[0].mxu0 %v202
  %v270 = vpop.f32.mrb[0].mxu0
  %v271 = vadd.f32 1e-10, %v270
  %v272 = vpop.f32.mrb[0].mxu0
  %273 = vdwg.mxu0
  %v274 = vlog2.pop %v271
  %v275 = vmul.f32 %v274, 0.6931472
  %v276 = vmul.f32 %v275, 0.4342945
  %277 = vst [vmem:[%s3] sm:$0xff] %v276
  // Predicated region
  $region14: #{rasr_logmel.1} parent=0 // pred_check
    _
  $region15: #{rasr_logmel.1} parent=0 // pred_check_branch
    %279 = sbr.rel (0) target = $region17
  $region16: #{rasr_logmel.1} parent=0 // pred_region
    _
  $region17: #{rasr_logmel.1} parent=0 // pred_fallthru
    _
  // Predicated region
  $region18: #{rasr_logmel.1} parent=0 // pred_check
    _
  $region19: #{rasr_logmel.1} parent=0 // pred_check_branch
    %281 = sbr.rel (0) target = $region21
  $region20: #{rasr_logmel.1} parent=0 // pred_region
    _
  $region21: #{rasr_logmel.1} parent=0 // pred_fallthru
    _

</llo_original>
